<compile_context>
chip_gen: v7x
topology: tpu7x:2x2x1
jax: 0.10.0
libtpu: 0.0.40
codegen_flags: <defaults>
</compile_context>

<pallas_src>
import jax
import jax.numpy as jnp
from jax import lax
from jax.experimental import pallas as pl
from jax.experimental.pallas import tpu as pltpu

_LANE = 128
_MAX_TILE_LANES = 32768                 # cap spatial tile at ~32768 lanes
_DEFAULT_VMEM_LIMIT = 32 * 1024 * 1024  # safe scoped limit on every generation


# ----------------------------------------------------------------------------
# NonNegativeParametrizer (compressai-style) -- pure parameter glue, plain JAX.
# ----------------------------------------------------------------------------
_REPARAM_OFFSET = 2.0 ** -18
_PEDESTAL = _REPARAM_OFFSET ** 2


def _nnp_init(x, minimum=0.0):
    # stored param = sqrt(max(x + pedestal, pedestal))
    del minimum
    return jnp.sqrt(jnp.maximum(x + _PEDESTAL, _PEDESTAL))


def _nnp_forward(stored, minimum=0.0):
    # forward: lower_bound(stored, bound)^2 - pedestal
    bound = (float(minimum) + _PEDESTAL) ** 0.5
    out = jnp.maximum(stored, bound)
    return out * out - _PEDESTAL


# ----------------------------------------------------------------------------
# Kernels.
#
# OOB invariant (documented per review): trailing spatial / batch blocks may be
# partial, so out-of-bounds lanes / batch rows of the input block contain
# garbage VMEM.  This is safe because (a) the only contraction is over the
# channel axis, which is never partial, so garbage stays in garbage columns,
# and (b) batch rows are independent; garbage outputs land only in lanes/rows
# whose stores are masked.  Do NOT add any lane-wise or batch-wise reduction to
# these kernels without masking first.
# ----------------------------------------------------------------------------
def _gdn_group_kernel(x_ref, gamma_ref, beta_ref, o_ref):
    """Per-group GDN. x_ref: (tile_n, cg, T); gamma: (cg, cg); beta: (cg, 1)."""
    gamma = gamma_ref[...]            # f32, or bf16 when matmul_dtype is set
    beta = beta_ref[...]              # (cg, 1) f32
    for b in range(x_ref.shape[0]):   # static unroll over the small batch tile
        x = x_ref[b].astype(jnp.float32)                       # (cg, T)
        x2 = x * x
        std = jnp.dot(gamma, x2.astype(gamma.dtype),
                      preferred_element_type=jnp.float32) + beta
        o_ref[b] = (x * lax.rsqrt(std)).astype(o_ref.dtype)


def _gdn_diag_kernel(x_ref, gamma_ref, beta_ref, o_ref):
    """groups == C fast path: diagonal gamma -> pure VPU multiply-add, no MXU."""
    gamma = gamma_ref[...]            # (C, 1) f32
    beta = beta_ref[...]              # (C, 1) f32
    x = x_ref[...].astype(jnp.float32)                         # (tile_n, C, T)
    std = gamma[None, :, :] * (x * x) + beta[None, :, :]
    o_ref[...] = (x * lax.rsqrt(std)).astype(o_ref.dtype)


# ----------------------------------------------------------------------------
# Tiling heuristics: byte-based, generation-aware.
# ----------------------------------------------------------------------------
def _vmem_limit_bytes():
    """min(64 MiB, physical_vmem/2): 32 MiB on v7x, 64 MiB on v5e/v6e."""
    try:
        info = pltpu.get_tpu_info()
        cap = int(getattr(info, "vmem_capacity_bytes", 0) or 0)
        if cap <= 0:
            return _DEFAULT_VMEM_LIMIT
        return int(min(64 * 1024 * 1024, max(_DEFAULT_VMEM_LIMIT, cap // 2)))
    except Exception:
        return _DEFAULT_VMEM_LIMIT


def _block_budget(vmem_limit, resident_bytes):
    """Bytes per activation block; resident (double-buffered gamma/beta) is
    subtracted first so wide-C configs still fit on v7x's smaller VMEM."""
    return int(max(1 << 20, min(8 << 20, (vmem_limit - resident_bytes) // 10)))


def _pick_tile_hw(hw, cg, itemsize, block_budget, min_spatial_tiles=1):
    """Largest lane-dense spatial tile whose (cg, tile) block fits block_budget,
    capped at 32768 lanes; optionally forced to yield >= min_spatial_tiles tiles
    so both v7x TensorCores get work when batch*groups == 1."""
    if hw <= _LANE:
        return hw                                  # full-extent block (legal)
    max_t = (block_budget // max(1, cg * itemsize)) // _LANE * _LANE
    t = min(max(_LANE, max_t), _MAX_TILE_LANES, (hw // _LANE) * _LANE)
    while pl.cdiv(hw, t) < min_spatial_tiles and t > _LANE:
        t = max(_LANE, (t // 2) // _LANE * _LANE)
    return t


def _pick_tile_n(n, g, cg, hw, tile_hw, itemsize, block_budget):
    """Block over batch when a single spatial tile covers the whole image, so
    one larger DMA replaces N tiny ones (small-image path)."""
    if tile_hw < hw:
        return 1
    lane_bytes = max(tile_hw, _LANE) * itemsize    # lanes pad to 128 in VMEM
    tn = block_budget // max(1, cg * lane_bytes)
    tn = int(max(1, min(8, n, tn)))                # cap static unroll at 8
    if g == 1 and tn >= n and n > 1:
        tn = max(1, n // 2)                        # keep >= 2 grid steps (v7x)
    return tn


# ----------------------------------------------------------------------------
# Pallas wrappers.
# ----------------------------------------------------------------------------
def _gdn_grouped(x, gamma_grp, beta_grp, *, vmem_limit, cost):
    """x: (N, C, H, W); gamma_grp: (G, C/G, C/G); beta_grp: (G, C/G, 1)."""
    n, c, h, w = x.shape
    g, cg, _ = gamma_grp.shape
    hw = h * w
    itemsize = x.dtype.itemsize
    x4 = x.reshape(n, g, cg, hw)                   # free view, no transpose/pad

    resident = 2 * (gamma_grp.size * gamma_grp.dtype.itemsize
                    + beta_grp.size * beta_grp.dtype.itemsize)
    budget = _block_budget(vmem_limit, resident)
    min_tiles = 2 if n * g == 1 else 1
    tile_hw = _pick_tile_hw(hw, cg, itemsize, budget, min_tiles)
    tile_n = _pick_tile_n(n, g, cg, hw, tile_hw, itemsize, budget)

    grid = (pl.cdiv(n, tile_n), g, pl.cdiv(hw, tile_hw))
    out = pl.pallas_call(
        _gdn_group_kernel,
        out_shape=jax.ShapeDtypeStruct((n, g, cg, hw), x.dtype),
        grid_spec=pltpu.PrefetchScalarGridSpec(
            num_scalar_prefetch=0,
            grid=grid,
            in_specs=[
                pl.BlockSpec((tile_n, None, cg, tile_hw),
                             lambda b, gi, t: (b, gi, 0, t)),
                # gamma/beta: tiny blocks, re-fetched only when the group
                # index changes (index_map independent of b, t).
                pl.BlockSpec((None, cg, cg), lambda b, gi, t: (gi, 0, 0)),
                pl.BlockSpec((None, cg, 1), lambda b, gi, t: (gi, 0, 0)),
            ],
            out_specs=pl.BlockSpec((tile_n, None, cg, tile_hw),
                                   lambda b, gi, t: (b, gi, 0, t)),
        ),
        compiler_params=pltpu.CompilerParams(
            dimension_semantics=("parallel", "parallel", "parallel"),
            vmem_limit_bytes=vmem_limit),
        cost_estimate=cost,
    )(x4, gamma_grp, beta_grp)
    return out.reshape(n, c, h, w)


def _gdn_diag(x, gamma_col, beta_col, *, vmem_limit, cost):
    """groups == C path. x: (N, C, H, W); gamma_col, beta_col: (C, 1)."""
    n, c, h, w = x.shape
    hw = h * w
    itemsize = x.dtype.itemsize
    x3 = x.reshape(n, c, hw)

    resident = 2 * (gamma_col.size + beta_col.size) * 4
    budget = _block_budget(vmem_limit, resident)
    min_tiles = 2 if n == 1 else 1
    tile_hw = _pick_tile_hw(hw, c, itemsize, budget, min_tiles)
    tile_n = _pick_tile_n(n, 1, c, hw, tile_hw, itemsize, budget)

    grid = (pl.cdiv(n, tile_n), pl.cdiv(hw, tile_hw))
    out = pl.pallas_call(
        _gdn_diag_kernel,
        out_shape=jax.ShapeDtypeStruct((n, c, hw), x.dtype),
        grid_spec=pltpu.PrefetchScalarGridSpec(
            num_scalar_prefetch=0,
            grid=grid,
            in_specs=[
                pl.BlockSpec((tile_n, c, tile_hw), lambda b, t: (b, 0, t)),
                pl.BlockSpec((c, 1), lambda b, t: (0, 0)),
                pl.BlockSpec((c, 1), lambda b, t: (0, 0)),
            ],
            out_specs=pl.BlockSpec((tile_n, c, tile_hw), lambda b, t: (b, 0, t)),
        ),
        compiler_params=pltpu.CompilerParams(
            dimension_semantics=("parallel", "parallel"),
            vmem_limit_bytes=vmem_limit),
        cost_estimate=cost,
    )(x3, gamma_col, beta_col)
    return out.reshape(n, c, h, w)


# ----------------------------------------------------------------------------
# GenDivNorm module equivalent.
# ----------------------------------------------------------------------------
class GenDivNorm:
    def __init__(self, inChannels: int, groups: int = 1,
                 biasBound: float = 1e-4, weightInit: float = 0.1,
                 matmul_dtype=None):
        if groups <= 0 or inChannels % groups != 0:
            raise ValueError(
                f"inChannels ({inChannels}) must be divisible by groups ({groups})")
        self.in_channels = inChannels
        self.groups = groups
        self.bias_bound = float(biasBound)
        # Optional reduced-precision matmul operands (e.g. jnp.bfloat16 for
        # wide C on v5e).  OFF by default: it does not meet 1e-5 tolerance.
        self.matmul_dtype = matmul_dtype

        cg = inChannels // groups
        # Deterministic init, mirroring the PyTorch __init__.
        beta = jnp.ones((inChannels,), jnp.float32)
        self.beta_param = _nnp_init(beta, minimum=self.bias_bound)       # (C,)
        gamma_blocks = [float(weightInit) * jnp.eye(cg, dtype=jnp.float32)
                        for _ in range(groups)]
        gamma = jnp.concatenate(gamma_blocks, axis=0)                    # (C, C/G)
        self.gamma_param = _nnp_init(gamma, minimum=0.0)

    def __call__(self, x):
        """x: (N, C, H, W) float32 -> (N, C, H, W)."""
        n, c, h, w = x.shape
        assert c == self.in_channels, "channel mismatch"
        g = self.groups
        cg = c // g
        hw = h * w
        itemsize = x.dtype.itemsize

        # Parameter reparametrization (glue, plain JAX).
        beta_eff = _nnp_forward(self.beta_param, minimum=self.bias_bound)  # (C,)
        gamma_eff = _nnp_forward(self.gamma_param, minimum=0.0)            # (C, C/G)

        vmem_limit = _vmem_limit_bytes()
        cost = pl.CostEstimate(
            flops=int(2 * n * c * cg * hw + 4 * n * c * hw),
            transcendentals=int(n * c * hw),
            bytes_accessed=int(2 * n * c * hw * itemsize + (gamma_eff.size + c) * 4),
        )

        if g == c:
            # Diagonal gamma: skip the MXU and the (C,C/G) matmul entirely.
            return _gdn_diag(x, gamma_eff.reshape(c, 1), beta_eff.reshape(c, 1),
                             vmem_limit=vmem_limit, cost=cost)

        gamma_grp = gamma_eff.reshape(g, cg, cg)    # per-group 1x1 conv weights
        if self.matmul_dtype is not None:
            gamma_grp = gamma_grp.astype(self.matmul_dtype)
        beta_grp = beta_eff.reshape(g, cg, 1)
        return _gdn_grouped(x, gamma_grp, beta_grp,
                            vmem_limit=vmem_limit, cost=cost)


# ----------------------------------------------------------------------------
# Plain-JAX reference (grouped 1x1 conv done by hand) for sanity checking.
# ----------------------------------------------------------------------------
def _reference_gdn(x, beta_eff, gamma_eff, groups):
    n, c, h, w = x.shape
    cg = c // groups
    x2 = x * x
    outs = []
    for gi in range(groups):
        xg = x2[:, gi * cg:(gi + 1) * cg]                     # (N, C/G, H, W)
        wg = gamma_eff[gi * cg:(gi + 1) * cg]                 # (C/G, C/G)
        outs.append(jnp.einsum('ij,njhw->nihw', wg, xg))
    std = jnp.concatenate(outs, axis=1) + beta_eff[None, :, None, None]
    return x * lax.rsqrt(std)


if __name__ == "__main__":
    def check(n, c, h, w, groups, seed):
        x = jax.random.normal(jax.random.PRNGKey(seed), (n, c, h, w), jnp.float32)
        gdn = GenDivNorm(inChannels=c, groups=groups)
        y = jax.block_until_ready(gdn(x))
        beta_eff = _nnp_forward(gdn.beta_param, minimum=gdn.bias_bound)
        gamma_eff = _nnp_forward(gdn.gamma_param, minimum=0.0)
        y_ref = _reference_gdn(x, beta_eff, gamma_eff, groups)
        assert y.shape == x.shape
        assert jnp.allclose(y, y_ref, atol=1e-5, rtol=1e-5), \
            f"mismatch vs reference (n={n}, c={c}, hw={h * w}, groups={groups})"

    # Main demo config (grouped path), deterministic PRNGKey(0).
    check(2, 4, 16, 16, groups=2, seed=0)
    # groups == 1 (dense single-group matmul path).
    check(2, 8, 8, 8, groups=1, seed=0)
    # groups == C (diagonal fast path, pure VPU).
    check(1, 8, 16, 16, groups=8, seed=0)

    print("KERNEL_OK")
</pallas_src>

<mosaic_0001>
module attributes {stable_mosaic.version = 11 : i64} {
  func.func @_gdn_group_kernel(%arg0: i32, %arg1: i32, %arg2: i32, %arg3: memref<2x1x2x256xf32, #tpu.memory_space<vmem>>, %arg4: memref<1x2x2xf32, #tpu.memory_space<vmem>>, %arg5: memref<1x2x1xf32, #tpu.memory_space<vmem>>, %arg6: memref<2x1x2x256xf32, #tpu.memory_space<vmem>>) attributes {dimension_semantics = [#tpu.dimension_semantics<parallel>, #tpu.dimension_semantics<parallel>, #tpu.dimension_semantics<parallel>], iteration_bounds = array<i64: 1, 2, 1>, scalar_prefetch = 0 : i64, scratch_operands = 0 : i64, tpu.core_type = #tpu.core_type<tc>, window_params = [{transform_indices = @transform_0, window_bounds = array<i64: 2, 1, 2, 256>}, {transform_indices = @transform_1, window_bounds = array<i64: 1, 2, 2>}, {transform_indices = @transform_2, window_bounds = array<i64: 1, 2, 1>}, {transform_indices = @transform_3, window_bounds = array<i64: 2, 1, 2, 256>}]} {
    %c0 = arith.constant 0 : index
    %c0_0 = arith.constant 0 : index
    %c0_1 = arith.constant 0 : index
    %0 = vector.load %arg4[%c0, %c0_0, %c0_1] : memref<1x2x2xf32, #tpu.memory_space<vmem>>, vector<1x2x2xf32>
    %1 = vector.shape_cast %0 : vector<1x2x2xf32> to vector<2x2xf32>
    %c0_2 = arith.constant 0 : index
    %c0_3 = arith.constant 0 : index
    %c0_4 = arith.constant 0 : index
    %2 = vector.load %arg5[%c0_2, %c0_3, %c0_4] : memref<1x2x1xf32, #tpu.memory_space<vmem>>, vector<1x2x1xf32>
    %3 = vector.shape_cast %2 : vector<1x2x1xf32> to vector<2x1xf32>
    %c0_5 = arith.constant 0 : index
    %c0_6 = arith.constant 0 : index
    %c0_7 = arith.constant 0 : index
    %c0_8 = arith.constant 0 : index
    %4 = vector.load %arg3[%c0_5, %c0_6, %c0_7, %c0_8] : memref<2x1x2x256xf32, #tpu.memory_space<vmem>>, vector<1x1x2x256xf32>
    %5 = vector.shape_cast %4 : vector<1x1x2x256xf32> to vector<2x256xf32>
    %6 = arith.mulf %5, %5 : vector<2x256xf32>
    %cst = arith.constant dense<0.000000e+00> : vector<2x256xf32>
    %7 = tpu.matmul %1, %6, %cst {dimension_numbers = #tpu.dot_dimension_numbers<[1], [0], [0], [1], [0, 0, 1, 1], [], []>} : vector<2x2xf32>, vector<2x256xf32>, vector<2x256xf32> -> vector<2x256xf32>
    %8 = vector.broadcast %3 : vector<2x1xf32> to vector<2x256xf32>
    %9 = arith.addf %7, %8 : vector<2x256xf32>
    %10 = math.rsqrt %9 : vector<2x256xf32>
    %11 = arith.mulf %5, %10 : vector<2x256xf32>
    %c0_9 = arith.constant 0 : index
    %c0_10 = arith.constant 0 : index
    %c0_11 = arith.constant 0 : index
    %c0_12 = arith.constant 0 : index
    %12 = vector.load %arg6[%c0_9, %c0_10, %c0_11, %c0_12] : memref<2x1x2x256xf32, #tpu.memory_space<vmem>>, vector<1x1x2x256xf32>
    %13 = vector.shape_cast %12 : vector<1x1x2x256xf32> to vector<2x256xf32>
    %14 = vector.shape_cast %11 : vector<2x256xf32> to vector<1x1x2x256xf32>
    tpu.vector_store %arg6[%c0_9, %c0_10, %c0_11, %c0_12], %14 {strides = array<i32>} : memref<2x1x2x256xf32, #tpu.memory_space<vmem>>, vector<1x1x2x256xf32>,
    %c1 = arith.constant 1 : index
    %c0_13 = arith.constant 0 : index
    %c0_14 = arith.constant 0 : index
    %c0_15 = arith.constant 0 : index
    %15 = vector.load %arg3[%c1, %c0_13, %c0_14, %c0_15] : memref<2x1x2x256xf32, #tpu.memory_space<vmem>>, vector<1x1x2x256xf32>
    %16 = vector.shape_cast %15 : vector<1x1x2x256xf32> to vector<2x256xf32>
    %17 = arith.mulf %16, %16 : vector<2x256xf32>
    %cst_16 = arith.constant dense<0.000000e+00> : vector<2x256xf32>
    %18 = tpu.matmul %1, %17, %cst_16 {dimension_numbers = #tpu.dot_dimension_numbers<[1], [0], [0], [1], [0, 0, 1, 1], [], []>} : vector<2x2xf32>, vector<2x256xf32>, vector<2x256xf32> -> vector<2x256xf32>
    %19 = vector.broadcast %3 : vector<2x1xf32> to vector<2x256xf32>
    %20 = arith.addf %18, %19 : vector<2x256xf32>
    %21 = math.rsqrt %20 : vector<2x256xf32>
    %22 = arith.mulf %16, %21 : vector<2x256xf32>
    %c1_17 = arith.constant 1 : index
    %c0_18 = arith.constant 0 : index
    %c0_19 = arith.constant 0 : index
    %c0_20 = arith.constant 0 : index
    %23 = vector.load %arg6[%c1_17, %c0_18, %c0_19, %c0_20] : memref<2x1x2x256xf32, #tpu.memory_space<vmem>>, vector<1x1x2x256xf32>
    %24 = vector.shape_cast %23 : vector<1x1x2x256xf32> to vector<2x256xf32>
    %25 = vector.shape_cast %22 : vector<2x256xf32> to vector<1x1x2x256xf32>
    tpu.vector_store %arg6[%c1_17, %c0_18, %c0_19, %c0_20], %25 {strides = array<i32>} : memref<2x1x2x256xf32, #tpu.memory_space<vmem>>, vector<1x1x2x256xf32>,
    return
  }
  func.func @transform_0(%arg0: i32, %arg1: i32, %arg2: i32) -> (i32, i32, i32, i32) {
    %c0_i32 = arith.constant 0 : i32
    %c0_i32_0 = arith.constant 0 : i32
    return %arg0, %arg1, %c0_i32, %arg2 : i32, i32, i32, i32
  }
  func.func @transform_1(%arg0: i32, %arg1: i32, %arg2: i32) -> (i32, i32, i32) {
    %c0_i32 = arith.constant 0 : i32
    %c0_i32_0 = arith.constant 0 : i32
    %c0_i32_1 = arith.constant 0 : i32
    return %arg1, %c0_i32, %c0_i32_0 : i32, i32, i32
  }
  func.func @transform_2(%arg0: i32, %arg1: i32, %arg2: i32) -> (i32, i32, i32) {
    %c0_i32 = arith.constant 0 : i32
    %c0_i32_0 = arith.constant 0 : i32
    %c0_i32_1 = arith.constant 0 : i32
    return %arg1, %c0_i32, %c0_i32_0 : i32, i32, i32
  }
  func.func @transform_3(%arg0: i32, %arg1: i32, %arg2: i32) -> (i32, i32, i32, i32) {
    %c0_i32 = arith.constant 0 : i32
    %c0_i32_0 = arith.constant 0 : i32
    return %arg0, %arg1, %c0_i32, %arg2 : i32, i32, i32, i32
  }
}

</mosaic_0001>

<llo_original>
// kernel: tpu_custom_call.1
$region0: #{tpu_custom_call.1}
  #allocation0 [shape = 'u32[]', space=smem, size = 0x4, offset = 0x4, fixed_abs, tag = 'smem constant byte address 0x4 - core index']
  #allocation1 [shape = 'u32[144,128]{1,0:T(1,128)}', space=vmem, size = 0x12000, scoped, tag = 'internal scratch']
  %s0 = inlined_call_operand.hbm [shape: f32[2,2,2,256], index: 0, kind: input, shape index: {}]
  %s1 = inlined_call_operand.vmem [shape: f32[2,2,2], index: 1, kind: input, shape index: {}]
  %s2 = inlined_call_operand.vmem [shape: f32[2,2,1], index: 2, kind: input, shape index: {}]
  %s3 = inlined_call_operand.hbm [shape: f32[2,2,2,256], index: 3, kind: output, shape index: {}]
  %s4 = sld [smem:[#allocation0]]
  $region49: #{tpu_custom_call.1} parent=0
    _
  %s6 = ssub.s32 1, %s4
  %s7 = scalar_select 0, %s6, %s4
  $region1: #{tpu_custom_call.1} parent=0
    #allocation2 [shape = 'u8[8192]{0}', space=vmem, size = 0x2000, scoped, tag = 'input window, operand 0']
    #allocation3 [shape = 's32[2]{0}', space=sflag, size = 0x8, scoped, tag = 'scoped memory for tpu_custom_call.1']
    #allocation4 [shape = 's32[2]{0}', space=sflag, size = 0x8, scoped, tag = 'scoped memory for tpu_custom_call.1']
    #allocation5 [shape = 'u8[8192]{0}', space=vmem, size = 0x2000, scoped, tag = 'output window, operand 0']
    %8 = vsyncpa [#allocation3], 0
    %s9 = scalar_lea.sflag [#allocation3], 1
    %10 = vsyncpa %s9, 0
    %11 = vsyncpa [#allocation4], 0
    %s12 = scalar_lea.sflag [#allocation4], 1
    %13 = vsyncpa %s12, 0
    loop: start=0, step=1, limit=4
    $region2: #{tpu_custom_call.1} parent=1 // loop_pre_header
      _
    $region3: #{tpu_custom_call.1} parent=1 // loop_header
      %s15 = sphi 0, %s19
      %p16 = scmp.ge.s32.totalorder %s15, 4
      %s22 = sphi 0, %s41
      %s23 = sphi 0, %s37
      %s24 = sphi 0, %s33
      %s25 = sphi 0, %s22
      %s26 = sphi 0, %s23
      %s27 = sphi 0, %s24
      %s28 = sphi 0, %s25
      %s29 = sphi 0, %s26
      %s30 = sphi 0, %s27
      %s48 = sphi 0, %s50
      %s51 = sphi 0, %s48
      %s52 = sphi 0, %s51
      %s68 = sphi 0, %s52
      %s74 = sphi 0, %s76
      %s77 = sphi 0, %s74
      %s78 = sphi 0, %s77
      %s94 = sphi 0, %s78
      %s100 = sphi 0, %s102
      %s103 = sphi 0, %s100
      %s104 = sphi 0, %s103
      %s120 = sphi 0, %s104
      %s130 = sphi 0, %s132
      %s133 = sphi 0, %s130
      %s134 = sphi 0, %s133
      %s150 = sphi 0, %s134
    $region4: #{tpu_custom_call.1} parent=1 // loop_header_branch
      %18 = sbr.rel (%p16) target = $region8
    $region5: #{tpu_custom_call.1} parent=1 // loop_body
      %s20 = ssub.s32 %s15, 1
      %s21 = ssub.s32 %s15, 2
      %s31 = sadd.s32 1, %s24
      %p32 = scmp.ge.s32.totalorder %s31, 1
      %s33 = scalar_select %p32, 0, %s31
      %s34 = sadd.s32 1, %s23
      %s35 = scalar_select %p32, %s34, %s23
      %p36 = scmp.ge.s32.totalorder %s35, 2
      %s37 = scalar_select %p36, 0, %s35
      %s38 = sadd.s32 1, %s22
      %s39 = scalar_select %p36, %s38, %s22
      %p40 = scmp.ge.s32.totalorder %s39, 1
      %s41 = scalar_select %p40, 0, %s39
      %s42 = ssub.s32 %s22, %s41
      %s43 = ssub.s32 %s23, %s37
      %s44 = sor.u32 %s42, %s43
      %s45 = ssub.s32 %s24, %s33
      %s46 = sor.u32 %s44, %s45
      %p47 = scmp.eq.s32.totalorder %s46, 0
      %s49 = sadd.s32 %s48, 1
      %s50 = scalar_select %p47, %s48, %s49
      %p53 = pneg %p47
      %p54 = scmp.eq.s32.totalorder %s15, 1
      %p55 = por %p53, %p54
      %p56 = scmp.ne.s32.totalorder %s48, %s51
      %p57 = scmp.eq.s32.totalorder %s15, 0
      %p58 = por %p56, %p57
      %p59 = scmp.ne.s32.totalorder %s48, %s51
      %p60 = scmp.eq.s32.totalorder %s20, 1
      %p61 = por %p59, %p60
      %p62 = scmp.ne.s32.totalorder %s51, %s52
      %p63 = scmp.eq.s32.totalorder %s20, 0
      %p64 = por %p62, %p63
      %p65 = scmp.ne.s32.totalorder %s51, %s52
      %p66 = scmp.eq.s32.totalorder %s21, 1
      %p67 = por %p65, %p66
      %p69 = scmp.ne.s32.totalorder %s52, %s68
      %p70 = scmp.eq.s32.totalorder %s21, 0
      %p71 = por %p69, %p70
      %s72 = ssub.s32 %s23, %s37
      %p73 = scmp.eq.s32.totalorder %s72, 0
      %s75 = sadd.s32 %s74, 1
      %s76 = scalar_select %p73, %s74, %s75
      %p79 = pneg %p73
      %p80 = scmp.eq.s32.totalorder %s15, 1
      %p81 = por %p79, %p80
      %p82 = scmp.ne.s32.totalorder %s74, %s77
      %p83 = scmp.eq.s32.totalorder %s15, 0
      %p84 = por %p82, %p83
      %p85 = scmp.ne.s32.totalorder %s74, %s77
      %p86 = scmp.eq.s32.totalorder %s20, 1
      %p87 = por %p85, %p86
      %p88 = scmp.ne.s32.totalorder %s77, %s78
      %p89 = scmp.eq.s32.totalorder %s20, 0
      %p90 = por %p88, %p89
      %p91 = scmp.ne.s32.totalorder %s77, %s78
      %p92 = scmp.eq.s32.totalorder %s21, 1
      %p93 = por %p91, %p92
      %p95 = scmp.ne.s32.totalorder %s78, %s94
      %p96 = scmp.eq.s32.totalorder %s21, 0
      %p97 = por %p95, %p96
      %s98 = ssub.s32 %s23, %s37
      %p99 = scmp.eq.s32.totalorder %s98, 0
      %s101 = sadd.s32 %s100, 1
      %s102 = scalar_select %p99, %s100, %s101
      %p105 = pneg %p99
      %p106 = scmp.eq.s32.totalorder %s15, 1
      %p107 = por %p105, %p106
      %p108 = scmp.ne.s32.totalorder %s100, %s103
      %p109 = scmp.eq.s32.totalorder %s15, 0
      %p110 = por %p108, %p109
      %p111 = scmp.ne.s32.totalorder %s100, %s103
      %p112 = scmp.eq.s32.totalorder %s20, 1
      %p113 = por %p111, %p112
      %p114 = scmp.ne.s32.totalorder %s103, %s104
      %p115 = scmp.eq.s32.totalorder %s20, 0
      %p116 = por %p114, %p115
      %p117 = scmp.ne.s32.totalorder %s103, %s104
      %p118 = scmp.eq.s32.totalorder %s21, 1
      %p119 = por %p117, %p118
      %p121 = scmp.ne.s32.totalorder %s104, %s120
      %p122 = scmp.eq.s32.totalorder %s21, 0
      %p123 = por %p121, %p122
      %s124 = ssub.s32 %s22, %s41
      %s125 = ssub.s32 %s23, %s37
      %s126 = sor.u32 %s124, %s125
      %s127 = ssub.s32 %s24, %s33
      %s128 = sor.u32 %s126, %s127
      %p129 = scmp.eq.s32.totalorder %s128, 0
      %s131 = sadd.s32 %s130, 1
      %s132 = scalar_select %p129, %s130, %s131
      %p135 = pneg %p129
      %p136 = scmp.eq.s32.totalorder %s15, 1
      %p137 = por %p135, %p136
      %p138 = scmp.ne.s32.totalorder %s130, %s133
      %p139 = scmp.eq.s32.totalorder %s15, 0
      %p140 = por %p138, %p139
      %p141 = scmp.ne.s32.totalorder %s130, %s133
      %p142 = scmp.eq.s32.totalorder %s20, 1
      %p143 = por %p141, %p142
      %p144 = scmp.ne.s32.totalorder %s133, %s134
      %p145 = scmp.eq.s32.totalorder %s20, 0
      %p146 = por %p144, %p145
      %p147 = scmp.ne.s32.totalorder %s133, %s134
      %p148 = scmp.eq.s32.totalorder %s21, 1
      %p149 = por %p147, %p148
      %p151 = scmp.ne.s32.totalorder %s134, %s150
      %p152 = scmp.eq.s32.totalorder %s21, 0
      %p153 = por %p151, %p152
      %p154 = scmp.le.s32.totalorder 1, %s15
      %p155 = scmp.lt.s32.totalorder %s15, 3
      %p156 = pnand %p154, %p155
      %p157 = pneg %p156
      // Predicated region
      $region9: #{tpu_custom_call.1} parent=5 // pred_check
        _
      $region10: #{tpu_custom_call.1} parent=5 // pred_check_branch
        %159 = sbr.rel (%p156) target = $region12
      $region11: #{tpu_custom_call.1} parent=5 // pred_region
        %s160 = ssub.s32 %s15, 1
      $region12: #{tpu_custom_call.1} parent=5 // pred_fallthru
        _
      %p161 = scmp.lt.s32.totalorder %s15, 2
      // Predicated region
      $region13: #{tpu_custom_call.1} parent=5 // pred_check
        %p162 = pneg %p161
      $region14: #{tpu_custom_call.1} parent=5 // pred_check_branch
        %164 = sbr.rel (%p162) target = $region16
      $region15: #{tpu_custom_call.1} parent=5 // pred_region
        // Predicated region
        $region17: #{tpu_custom_call.1} parent=15 // pred_check
          %p165 = pneg %p58
        $region18: #{tpu_custom_call.1} parent=15 // pred_check_branch
          %167 = sbr.rel (%p165) target = $region20
        $region19: #{tpu_custom_call.1} parent=15 // pred_region
          %s168 = sand.u32 %s48, 1
          %s169 = scalar_lea.sflag [#allocation3], %s168
          %s170 = sand.u32 %s48, 1
          %s171 = smul.addr %s170, 8
          %s172 = scalar_lea.vmem [#allocation2], %s171
          %s173 = smul.u32 2, %s22
          %s174 = smul.u32 2, %s24
          %s176 = ssub.s32 128, 128
          %177 = vsyncadd %s169, %s176
          %s178 = smul.addr %s23, 2
          %s179 = sadd.s32 %s174, %s178
          %s180 = smul.addr %s173, 4
          %s181 = sadd.s32 %s179, %s180
          %s182 = smul.addr %s181, 32
          %s183 = scalar_lea.hbm %s0, %s182
          %s184 = sshll.u32 %s172, 4
          %s185 = int_to_ptr.vmem [resolvable:$true] %s184
          %190 = dma.hbm_to_vmem [thread:$0]  %s183, 128, %s185, %s169, 128, 64, 4
        $region20: #{tpu_custom_call.1} parent=15 // pred_fallthru
          _
        // Predicated region
        $region21: #{tpu_custom_call.1} parent=15 // pred_check
          %p191 = pneg %p84
        $region22: #{tpu_custom_call.1} parent=15 // pred_check_branch
          %193 = sbr.rel (%p191) target = $region24
        $region23: #{tpu_custom_call.1} parent=15 // pred_region
          %p194 = scmp.lt.s32.totalorder %s23, 1
          %s195 = scalar_select %p194, %s23, 1
          %s196 = smul.addr %s195, 2
          %s197 = scalar_lea.vmem %s1, %s196
        $region24: #{tpu_custom_call.1} parent=15 // pred_fallthru
          _
        // Predicated region
        $region25: #{tpu_custom_call.1} parent=15 // pred_check
          %p198 = pneg %p110
        $region26: #{tpu_custom_call.1} parent=15 // pred_check_branch
          %200 = sbr.rel (%p198) target = $region28
        $region27: #{tpu_custom_call.1} parent=15 // pred_region
          %p201 = scmp.lt.s32.totalorder %s23, 1
          %s202 = scalar_select %p201, %s23, 1
          %s203 = smul.addr %s202, 2
          %s204 = scalar_lea.vmem %s2, %s203
        $region28: #{tpu_custom_call.1} parent=15 // pred_fallthru
          _
      $region16: #{tpu_custom_call.1} parent=5 // pred_fallthru
        _
      %p205 = scmp.le.s32.totalorder 1, %s15
      %p206 = scmp.lt.s32.totalorder %s15, 3
      %p207 = pnand %p205, %p206
      %p208 = pneg %p207
      // Predicated region
      $region29: #{tpu_custom_call.1} parent=5 // pred_check
        _
      $region30: #{tpu_custom_call.1} parent=5 // pred_check_branch
        %210 = sbr.rel (%p207) target = $region32
      $region31: #{tpu_custom_call.1} parent=5 // pred_region
        %s211 = ssub.s32 %s15, 1
        %s212 = sand.u32 %s51, 1
        %s213 = scalar_lea.sflag [#allocation3], %s212
        %s214 = sand.u32 %s51, 1
        %s215 = smul.addr %s214, 8
        %s216 = scalar_lea.vmem [#allocation2], %s215
        // Predicated region
        $region33: #{tpu_custom_call.1} parent=31 // pred_check
          %p217 = pneg %p64
        $region34: #{tpu_custom_call.1} parent=31 // pred_check_branch
          %219 = sbr.rel (%p217) target = $region36
        $region35: #{tpu_custom_call.1} parent=31 // pred_region
          %220 = dma.done %s213, 128
        $region36: #{tpu_custom_call.1} parent=31 // pred_fallthru
          _
        %s221 = sand.u32 %s51, 1
        %s222 = scalar_lea.sflag [#allocation3], %s221
        %s223 = sand.u32 %s51, 1
        %s224 = smul.addr %s223, 8
        %s225 = scalar_lea.vmem [#allocation2], %s224
        %p226 = pneg %p64
        %p227 = pneg %p61
        %p228 = scmp.lt.s32.totalorder %s26, 1
        %s229 = scalar_select %p228, %s26, 1
        %s230 = smul.addr %s229, 2
        %s231 = scalar_lea.vmem %s1, %s230
        %p232 = pneg %p90
        %p233 = pneg %p87
        %p234 = scmp.lt.s32.totalorder %s26, 1
        %s235 = scalar_select %p234, %s26, 1
        %s236 = smul.addr %s235, 2
        %s237 = scalar_lea.vmem %s2, %s236
        %p238 = pneg %p116
        %p239 = pneg %p113
        %p240 = pneg %p146
        %p241 = pneg %p143
        %s242 = sand.u32 %s133, 1
        %s243 = scalar_lea.sflag [#allocation4], %s242
        %s244 = sand.u32 %s133, 1
        %s245 = smul.addr %s244, 8
        %s246 = scalar_lea.vmem [#allocation5], %s245
        %s247 = smul.u32 2, %s25
        %s248 = smul.u32 2, %s27
        %p249 = scmp.lt.s32.totalorder %s26, 1
        %s250 = scalar_select %p249, %s26, 1
        %s251 = smul.addr %s250, 2
        %s252 = scalar_lea.vmem %s1, %s251
        %p253 = scmp.lt.s32.totalorder %s26, 1
        %s254 = scalar_select %p253, %s26, 1
        %s255 = smul.addr %s254, 2
        %s256 = scalar_lea.vmem %s2, %s255
        %s257 = smul.u32 2, %s25
        %s258 = smul.u32 2, %s27
        %v259 = vld [vmem:[%s252] sm:$0x3]
        %v260 = vld [vmem:[%s256] sm:$0x3]
        %v261 = vld [vmem:[%s216] sm:$0xf]
        %v262 = vmul.f32 %v261, %v261
        %264 = vset.pattern.permute.xlu0 0
        %265 = vperm.xlu0 %264, %v260
        %v266 = vpop.permute.xlu0 %265
        %v270 = vunpack.c.l.s4 1983009808
        %v271 = vunpack.c.0.s8 %v270
        %v272 = vlaneseq
        %v273 = vshrl.u32 %v272, 7
        %v274 = vsub.s32 %v271, %v273
        %v275 = vrot.slane %v262, %v274
        %v276 = vcombine.high %v275, %v275
        %vm277 = vcmask 15360
        %v279 = vsel %vm277, %v259, 0
        %vm281 = vcmask 1041408
        %v282 = vsel %vm281, %v275, 0
        %v284 = vsel %vm281, %v276, 0
        %286 = vmatprep.subr.mxu0 %v284
        %287 = vmatpush1.msra.mxu0 %v282
        %288 = vmatprep.subr.mxu0 0.0
        %289 = vmatpush1.msra.mxu0 0.0
        %290 = vmatprep.subr.mxu0 0.0
        %291 = vmatpush1.msra.mxu0 0.0
        %292 = vmatprep.subr.mxu0 0.0
        %293 = vmatpush1.msra.mxu0 0.0
        %294 = vmatprep.subr.mxu0 0.0
        %295 = vmatpush1.msra.mxu0 0.0
        %296 = vmatprep.subr.mxu0 0.0
        %297 = vmatpush1.msra.mxu0 0.0
        %298 = vmatprep.subr.mxu0 0.0
        %299 = vmatpush1.msra.mxu0 0.0
        %300 = vmatprep.subr.mxu0 0.0
        %301 = vmatpush1.msra.mxu0 0.0
        %302 = vmatprep.subr.mxu0 0.0
        %303 = vmatpush1.msra.mxu0 0.0
        %304 = vmatprep.subr.mxu0 0.0
        %305 = vmatpush1.msra.mxu0 0.0
        %306 = vmatprep.subr.mxu0 0.0
        %307 = vmatpush1.msra.mxu0 0.0
        %308 = vmatprep.subr.mxu0 0.0
        %309 = vmatpush1.msra.mxu0 0.0
        %310 = vmatprep.subr.mxu0 0.0
        %311 = vmatpush1.msra.mxu0 0.0
        %312 = vmatprep.subr.mxu0 0.0
        %313 = vmatpush1.msra.mxu0 0.0
        %314 = vmatprep.subr.mxu0 0.0
        %315 = vmatpush1.msra.mxu0 0.0
        %316 = vmatprep.subr.mxu0 0.0
        %317 = vmatpush1.msra.mxu0 0.0
        %318 = vmatprep.subr.mxu0 0.0
        %319 = vmatpush1.msra.mxu0 0.0
        %320 = vmatprep.subr.mxu0 0.0
        %321 = vmatpush1.msra.mxu0 0.0
        %322 = vmatprep.subr.mxu0 0.0
        %323 = vmatpush1.msra.mxu0 0.0
        %324 = vmatprep.subr.mxu0 0.0
        %325 = vmatpush1.msra.mxu0 0.0
        %326 = vmatprep.subr.mxu0 0.0
        %327 = vmatpush1.msra.mxu0 0.0
        %328 = vmatprep.subr.mxu0 0.0
        %329 = vmatpush1.msra.mxu0 0.0
        %330 = vmatprep.subr.mxu0 0.0
        %331 = vmatpush1.msra.mxu0 0.0
        %332 = vmatprep.subr.mxu0 0.0
        %333 = vmatpush1.msra.mxu0 0.0
        %334 = vmatprep.subr.mxu0 0.0
        %335 = vmatpush1.msra.mxu0 0.0
        %336 = vmatprep.subr.mxu0 0.0
        %337 = vmatpush1.msra.mxu0 0.0
        %338 = vmatprep.subr.mxu0 0.0
        %339 = vmatpush1.msra.mxu0 0.0
        %340 = vmatprep.subr.mxu0 0.0
        %341 = vmatpush1.msra.mxu0 0.0
        %342 = vmatprep.subr.mxu0 0.0
        %343 = vmatpush1.msra.mxu0 0.0
        %344 = vmatprep.subr.mxu0 0.0
        %345 = vmatpush1.msra.mxu0 0.0
        %346 = vmatprep.subr.mxu0 0.0
        %347 = vmatpush1.msra.mxu0 0.0
        %348 = vmatprep.subr.mxu0 0.0
        %349 = vmatpush1.msra.mxu0 0.0
        %350 = vmatprep.mubr.f32.mxu0 0.0
        %351 = vmatmul.mubr.f32.gmra.mrb[0].mxu0 %v279
        %v352 = vpop.f32.mrb[0].mxu0
        %v353 = vadd.f32 %v266, %v352
        %v354 = vpop.f32.mrb[0].mxu0
        %v355 = vadd.f32 %v266, %v354
        %356 = vdwg.mxu0
        %v357 = vrsqrt.pop %v353
        %v358 = vrsqrt.pop %v355
        %v361 = vcombine.low %v357, %v358
        %v363 = vunpack.c.l.s4 1983009808
        %v364 = vunpack.c.0.s8 %v363
        %v365 = vlaneseq
        %v366 = vshrl.u32 %v365, 7
        %v367 = vsub.s32 %v364, %v366
        %v368 = vrot.slane %v361, %v367
        %v370 = vmul.f32 %v261, %v368
        %371 = vst [vmem:[%s246] sm:$0xf] %v370
        %s372 = scalar_lea.vmem %s216, 4 [#allocation2]
        %v373 = vld [vmem:[%s372] sm:$0xf]
        %v374 = vmul.f32 %v373, %v373
        %v377 = vunpack.c.l.s4 1983009808
        %v378 = vunpack.c.0.s8 %v377
        %v379 = vlaneseq
        %v380 = vshrl.u32 %v379, 7
        %v381 = vsub.s32 %v378, %v380
        %v382 = vrot.slane %v374, %v381
        %v383 = vcombine.high %v382, %v382
        %v384 = vsel %vm281, %v382, 0
        %v386 = vsel %vm281, %v383, 0
        %388 = vmatprep.subr.mxu0 %v386
        %389 = vmatpush1.msra.mxu0 %v384
        %390 = vmatprep.subr.mxu0 0.0
        %391 = vmatpush1.msra.mxu0 0.0
        %392 = vmatprep.subr.mxu0 0.0
        %393 = vmatpush1.msra.mxu0 0.0
        %394 = vmatprep.subr.mxu0 0.0
        %395 = vmatpush1.msra.mxu0 0.0
        %396 = vmatprep.subr.mxu0 0.0
        %397 = vmatpush1.msra.mxu0 0.0
        %398 = vmatprep.subr.mxu0 0.0
        %399 = vmatpush1.msra.mxu0 0.0
        %400 = vmatprep.subr.mxu0 0.0
        %401 = vmatpush1.msra.mxu0 0.0
        %402 = vmatprep.subr.mxu0 0.0
        %403 = vmatpush1.msra.mxu0 0.0
        %404 = vmatprep.subr.mxu0 0.0
        %405 = vmatpush1.msra.mxu0 0.0
        %406 = vmatprep.subr.mxu0 0.0
        %407 = vmatpush1.msra.mxu0 0.0
        %408 = vmatprep.subr.mxu0 0.0
        %409 = vmatpush1.msra.mxu0 0.0
        %410 = vmatprep.subr.mxu0 0.0
        %411 = vmatpush1.msra.mxu0 0.0
        %412 = vmatprep.subr.mxu0 0.0
        %413 = vmatpush1.msra.mxu0 0.0
        %414 = vmatprep.subr.mxu0 0.0
        %415 = vmatpush1.msra.mxu0 0.0
        %416 = vmatprep.subr.mxu0 0.0
        %417 = vmatpush1.msra.mxu0 0.0
        %418 = vmatprep.subr.mxu0 0.0
        %419 = vmatpush1.msra.mxu0 0.0
        %420 = vmatprep.subr.mxu0 0.0
        %421 = vmatpush1.msra.mxu0 0.0
        %422 = vmatprep.subr.mxu0 0.0
        %423 = vmatpush1.msra.mxu0 0.0
        %424 = vmatprep.subr.mxu0 0.0
        %425 = vmatpush1.msra.mxu0 0.0
        %426 = vmatprep.subr.mxu0 0.0
        %427 = vmatpush1.msra.mxu0 0.0
        %428 = vmatprep.subr.mxu0 0.0
        %429 = vmatpush1.msra.mxu0 0.0
        %430 = vmatprep.subr.mxu0 0.0
        %431 = vmatpush1.msra.mxu0 0.0
        %432 = vmatprep.subr.mxu0 0.0
        %433 = vmatpush1.msra.mxu0 0.0
        %434 = vmatprep.subr.mxu0 0.0
        %435 = vmatpush1.msra.mxu0 0.0
        %436 = vmatprep.subr.mxu0 0.0
        %437 = vmatpush1.msra.mxu0 0.0
        %438 = vmatprep.subr.mxu0 0.0
        %439 = vmatpush1.msra.mxu0 0.0
        %440 = vmatprep.subr.mxu0 0.0
        %441 = vmatpush1.msra.mxu0 0.0
        %442 = vmatprep.subr.mxu0 0.0
        %443 = vmatpush1.msra.mxu0 0.0
        %444 = vmatprep.subr.mxu0 0.0
        %445 = vmatpush1.msra.mxu0 0.0
        %446 = vmatprep.subr.mxu0 0.0
        %447 = vmatpush1.msra.mxu0 0.0
        %448 = vmatprep.subr.mxu0 0.0
        %449 = vmatpush1.msra.mxu0 0.0
        %450 = vmatprep.subr.mxu0 0.0
        %451 = vmatpush1.msra.mxu0 0.0
        %452 = vmatprep.mubr.f32.mxu0 0.0
        %453 = vmatmul.mubr.f32.gmra.mrb[0].mxu0 %v279
        %v454 = vpop.f32.mrb[0].mxu0
        %v455 = vadd.f32 %v266, %v454
        %v456 = vpop.f32.mrb[0].mxu0
        %v457 = vadd.f32 %v266, %v456
        %458 = vdwg.mxu0
        %v459 = vrsqrt.pop %v455
        %v460 = vrsqrt.pop %v457
        %v463 = vcombine.low %v459, %v460
        %v465 = vunpack.c.l.s4 1983009808
        %v466 = vunpack.c.0.s8 %v465
        %v467 = vlaneseq
        %v468 = vshrl.u32 %v467, 7
        %v469 = vsub.s32 %v466, %v468
        %v470 = vrot.slane %v463, %v469
        %v472 = vmul.f32 %v373, %v470
        %s473 = scalar_lea.vmem %s246, 4 [#allocation5]
        %474 = vst [vmem:[%s473] sm:$0xf] %v472
        %s475 = sand.u32 %s133, 1
        %s476 = scalar_lea.sflag [#allocation4], %s475
        %s477 = sand.u32 %s133, 1
        %s478 = smul.addr %s477, 8
        %s479 = scalar_lea.vmem [#allocation5], %s478
        // Predicated region
        $region37: #{tpu_custom_call.1} parent=31 // pred_check
          %p480 = pneg %p143
        $region38: #{tpu_custom_call.1} parent=31 // pred_check_branch
          %482 = sbr.rel (%p480) target = $region40
        $region39: #{tpu_custom_call.1} parent=31 // pred_region
          %s483 = smul.u32 2, %s25
          %s484 = smul.u32 2, %s27
          %s486 = ssub.s32 128, 128
          %487 = vsyncadd %s476, %s486
          %s488 = smul.addr %s26, 2
          %s489 = sadd.s32 %s484, %s488
          %s490 = smul.addr %s483, 4
          %s491 = sadd.s32 %s489, %s490
          %s492 = smul.addr %s491, 32
          %s493 = scalar_lea.hbm %s3, %s492
          %s494 = sshll.u32 %s479, 4
          %s495 = int_to_ptr.vmem [resolvable:$true] %s494
          %500 = dma.vmem_to_hbm [thread:$0]  %s495, 128, %s493, %s476, 64, 128, 4
        $region40: #{tpu_custom_call.1} parent=31 // pred_fallthru
          _
      $region32: #{tpu_custom_call.1} parent=5 // pred_fallthru
        _
      %p501 = scmp.le.s32.totalorder 2, %s15
      // Predicated region
      $region41: #{tpu_custom_call.1} parent=5 // pred_check
        %p502 = pneg %p501
      $region42: #{tpu_custom_call.1} parent=5 // pred_check_branch
        %504 = sbr.rel (%p502) target = $region44
      $region43: #{tpu_custom_call.1} parent=5 // pred_region
        %s505 = ssub.s32 %s15, 2
        // Predicated region
        $region45: #{tpu_custom_call.1} parent=43 // pred_check
          %p506 = pneg %p149
        $region46: #{tpu_custom_call.1} parent=43 // pred_check_branch
          %508 = sbr.rel (%p506) target = $region48
        $region47: #{tpu_custom_call.1} parent=43 // pred_region
          %s509 = sand.u32 %s134, 1
          %s510 = scalar_lea.sflag [#allocation4], %s509
          %s511 = sand.u32 %s134, 1
          %s512 = smul.addr %s511, 8
          %s513 = scalar_lea.vmem [#allocation5], %s512
          %514 = dma.done %s510, 128
        $region48: #{tpu_custom_call.1} parent=43 // pred_fallthru
          _
      $region44: #{tpu_custom_call.1} parent=5 // pred_fallthru
        _
    $region6: #{tpu_custom_call.1} parent=1 // loop_footer
      %s19 = sadd.s32 1, %s15
    $region7: #{tpu_custom_call.1} parent=1 // loop_footer_branch
      %14 = sbr.rel target = $region3
    $region8: #{tpu_custom_call.1} parent=1 // loop_exit
      _
    %515 = vsyncpa [#allocation3], 1
    %s516 = scalar_lea.sflag [#allocation3], 1
    %517 = vsyncpa %s516, 1
    %518 = vsyncpa [#allocation4], 1
    %s519 = scalar_lea.sflag [#allocation4], 1
    %520 = vsyncpa %s519, 1

</llo_original>
